<compile_context>
chip_gen: v5e
topology: v5e:2x2
jax: 0.10.0
libtpu: 0.0.40
codegen_flags: <defaults>
</compile_context>

<pallas_src>
import functools
import math

import jax
import jax.numpy as jnp
from jax.experimental import pallas as pl
from jax.experimental.pallas import tpu as pltpu


def _cos_kernel(emb_ref, wt_ref, out_ref):
    """labels=None path: cosine logits only (single output)."""
    emb_n = emb_ref[...]                                   # [B, D] pre-normalized
    w_t = wt_ref[...]                                      # [D, TN] un-normalized
    # Per-class inverse norms as a lane-aligned [1, TN] row (EUP rsqrt).
    w_ss = jnp.sum(w_t * w_t, axis=0, keepdims=True)
    inv_w = jax.lax.rsqrt(jnp.maximum(w_ss, 1e-24))        # == 1/max(||w||,1e-12)
    raw = jnp.dot(emb_n, w_t, preferred_element_type=jnp.float32)
    out_ref[...] = raw * inv_w


def _margin_kernel(emb_ref, wt_ref, lab_ref, logits_ref, orig_ref,
                   *, s, cos_m2, sin_m2, m3):
    emb_n = emb_ref[...]                                   # [B, D] pre-normalized
    w_t = wt_ref[...]                                      # [D, TN]
    w_ss = jnp.sum(w_t * w_t, axis=0, keepdims=True)       # [1, TN]
    inv_w = jax.lax.rsqrt(jnp.maximum(w_ss, 1e-24))
    raw = jnp.dot(emb_n, w_t, preferred_element_type=jnp.float32)
    cos = raw * inv_w                                      # [B, TN] cosine logits
    orig_ref[...] = cos

    # --- combined margin on the target column of each row (m1 == 1.0) ---
    labels = lab_ref[...]                                  # [B, 1] int32
    tn = cos.shape[-1]
    cls_idx = (jax.lax.broadcasted_iota(jnp.int32, cos.shape, 1)
               + pl.program_id(0) * tn)
    is_target = jnp.logical_and(cls_idx == labels, labels >= 0)

    cos_c = jnp.clip(cos, -1.0, 1.0)
    sin_c = jnp.sqrt(jnp.maximum(1.0 - cos_c * cos_c, 0.0))
    adjusted = cos_c * cos_m2 - sin_c * sin_m2 - m3        # cos(theta+m2) - m3

    logits_ref[...] = jnp.where(is_target, adjusted, cos) * s


def _choose_class_tile(C):
    """Largest tile <= 2048 that divides C while keeping >= 2 grid steps."""
    for t in (2048, 1024, 512, 256, 128):
        if C % t == 0 and C // t >= 2:
            return t
    return C  # small C: single tile covering the whole class axis


def normalized_margin_head(embeddings, weight, labels=None,
                           *, s=64.0, m2=0.5, m3=0.0, class_tile=None):
    """embeddings: [B, D] f32, weight: [C, D] f32, labels: [B] int32 or None."""
    B, D = embeddings.shape
    C, D2 = weight.shape
    assert D == D2

    if class_tile is None:
        class_tile = _choose_class_tile(C)
    assert C % class_tile == 0
    grid = (C // class_tile,)

    # --- hoist embedding L2-normalization out of the per-tile kernel body ---
    emb_f32 = embeddings.astype(jnp.float32)
    emb_ss = jnp.sum(emb_f32 * emb_f32, axis=1, keepdims=True)
    emb_n = emb_f32 * jax.lax.rsqrt(jnp.maximum(emb_ss, 1e-24))   # x/max(||x||,1e-12)

    # --- pre-transpose the weight once: [C, D] -> [D, C] (lane-dense MXU RHS) ---
    w_t = weight.astype(jnp.float32).T

    # --- explicit VMEM budget: double-buffered emb / weight tile / outputs ---
    n_out = 1 if labels is None else 2
    vmem_bytes = (2 * B * D * 4                       # embeddings block
                  + 2 * class_tile * D * 4            # weight tile
                  + n_out * 2 * B * class_tile * 4    # output tiles
                  + 2 * B * 4                         # labels
                  + (2 << 20))                        # headroom
    vmem_limit = int(min(max(vmem_bytes, 16 << 20), 64 << 20))  # v7x phys = 64 MiB

    cparams = pltpu.CompilerParams(
        dimension_semantics=("parallel",),
        vmem_limit_bytes=vmem_limit)

    if labels is None:
        out = pl.pallas_call(
            _cos_kernel,
            out_shape=jax.ShapeDtypeStruct((B, C), jnp.float32),
            grid_spec=pltpu.PrefetchScalarGridSpec(
                num_scalar_prefetch=0,
                grid=grid,
                in_specs=[
                    pl.BlockSpec((B, D), lambda j: (0, 0)),            # normalized emb
                    pl.BlockSpec((D, class_tile), lambda j: (0, j)),   # weight tile
                ],
                out_specs=pl.BlockSpec((B, class_tile), lambda j: (0, j)),
            ),
            compiler_params=cparams,
        )(emb_n, w_t)
        return out, out

    labels2d = labels.astype(jnp.int32).reshape(B, 1)
    kernel = functools.partial(_margin_kernel, s=s,
                               cos_m2=math.cos(m2), sin_m2=math.sin(m2), m3=m3)

    logits, original_logits = pl.pallas_call(
        kernel,
        out_shape=(jax.ShapeDtypeStruct((B, C), jnp.float32),
                   jax.ShapeDtypeStruct((B, C), jnp.float32)),
        grid_spec=pltpu.PrefetchScalarGridSpec(
            num_scalar_prefetch=0,
            grid=grid,
            in_specs=[
                pl.BlockSpec((B, D), lambda j: (0, 0)),            # normalized emb
                pl.BlockSpec((D, class_tile), lambda j: (0, j)),   # weight tile
                pl.BlockSpec((B, 1), lambda j: (0, 0)),            # labels (replicated)
            ],
            out_specs=[
                pl.BlockSpec((B, class_tile), lambda j: (0, j)),   # margin logits
                pl.BlockSpec((B, class_tile), lambda j: (0, j)),   # original logits
            ],
        ),
        compiler_params=cparams,
    )(emb_n, w_t, labels2d)

    return logits, original_logits


def _reference(embeddings, weight, labels, s, m2, m3):
    """Pure-JAX reference for a sanity check."""
    e = embeddings / jnp.maximum(
        jnp.linalg.norm(embeddings, axis=1, keepdims=True), 1e-12)
    w = weight / jnp.maximum(
        jnp.linalg.norm(weight, axis=1, keepdims=True), 1e-12)
    cos = e @ w.T
    onehot = (labels[:, None] == jnp.arange(cos.shape[1])[None, :]) & (labels[:, None] >= 0)
    cos_c = jnp.clip(cos, -1.0, 1.0)
    sin_c = jnp.sqrt(jnp.maximum(1.0 - cos_c * cos_c, 0.0))
    adj = cos_c * math.cos(m2) - sin_c * math.sin(m2) - m3
    return jnp.where(onehot, adj, cos) * s, cos


if __name__ == "__main__":
    key = jax.random.PRNGKey(0)
    k_emb, k_w, k_lab = jax.random.split(key, 3)

    batch = 8
    embedding_size = 32
    num_classes = 512
    s, m2, m3 = 64.0, 0.5, 0.0   # ArcFace-style combined margin (m1 = 1.0)

    embeddings = jax.random.normal(k_emb, (batch, embedding_size), dtype=jnp.float32)

    # Xavier-uniform init for weight (num_classes, embedding_size), matching
    # nn.init.xavier_uniform_: bound = sqrt(6 / (fan_in + fan_out)).
    bound = math.sqrt(6.0 / (embedding_size + num_classes))
    weight = jax.random.uniform(k_w, (num_classes, embedding_size),
                                minval=-bound, maxval=bound, dtype=jnp.float32)

    labels = jax.random.randint(k_lab, (batch,), 0, num_classes, dtype=jnp.int32)
    labels = labels.at[0].set(-1)   # exercise the "no margin for label == -1" path

    logits, original_logits = normalized_margin_head(
        embeddings, weight, labels, s=s, m2=m2, m3=m3)
    jax.block_until_ready((logits, original_logits))

    ref_logits, ref_orig = _reference(embeddings, weight, labels, s, m2, m3)
    assert jnp.allclose(logits, ref_logits, atol=1e-4, rtol=1e-4)
    assert jnp.allclose(original_logits, ref_orig, atol=1e-5, rtol=1e-5)

    # labels=None path: margin branch skipped, single kernel output returned twice.
    l2, o2 = normalized_margin_head(embeddings, weight, None, s=s, m2=m2, m3=m3)
    jax.block_until_ready((l2, o2))
    assert jnp.allclose(l2, ref_orig, atol=1e-5, rtol=1e-5)
    assert jnp.allclose(o2, ref_orig, atol=1e-5, rtol=1e-5)

    print("KERNEL_OK")
</pallas_src>

<mosaic_0001>
module attributes {stable_mosaic.version = 11 : i64} {
  func.func @_margin_kernel(%arg0: i32, %arg1: memref<8x32xf32, #tpu.memory_space<vmem>>, %arg2: memref<32x256xf32, #tpu.memory_space<vmem>>, %arg3: memref<8x1xi32, #tpu.memory_space<vmem>>, %arg4: memref<8x256xf32, #tpu.memory_space<vmem>>, %arg5: memref<8x256xf32, #tpu.memory_space<vmem>>) attributes {dimension_semantics = [#tpu.dimension_semantics<parallel>], iteration_bounds = array<i64: 2>, scalar_prefetch = 0 : i64, scratch_operands = 0 : i64, tpu.core_type = #tpu.core_type<tc>, window_params = [{pipeline_mode = #tpu.pipeline_mode<synchronous>, transform_indices = @transform_0, window_bounds = array<i64: 8, 32>}, {transform_indices = @transform_1, window_bounds = array<i64: 32, 256>}, {pipeline_mode = #tpu.pipeline_mode<synchronous>, transform_indices = @transform_2, window_bounds = array<i64: 8, 1>}, {transform_indices = @transform_3, window_bounds = array<i64: 8, 256>}, {transform_indices = @transform_4, window_bounds = array<i64: 8, 256>}]} {
    %c0 = arith.constant 0 : index
    %c0_0 = arith.constant 0 : index
    %0 = vector.load %arg1[%c0, %c0_0] : memref<8x32xf32, #tpu.memory_space<vmem>>, vector<8x32xf32>
    %c0_1 = arith.constant 0 : index
    %c0_2 = arith.constant 0 : index
    %1 = vector.load %arg2[%c0_1, %c0_2] : memref<32x256xf32, #tpu.memory_space<vmem>>, vector<32x256xf32>
    %2 = arith.mulf %1, %1 : vector<32x256xf32>
    %cst = arith.constant dense<0.000000e+00> : vector<256xf32>
    %3 = vector.multi_reduction <add>, %2, %cst [0] : vector<32x256xf32> to vector<256xf32>
    %4 = vector.shape_cast %3 : vector<256xf32> to vector<1x256xf32>
    %cst_3 = arith.constant 1.000000e-24 : f32
    %5 = vector.broadcast %cst_3 : f32 to vector<1x256xf32>
    %6 = arith.maximumf %4, %5 : vector<1x256xf32>
    %7 = math.rsqrt %6 : vector<1x256xf32>
    %cst_4 = arith.constant dense<0.000000e+00> : vector<8x256xf32>
    %8 = tpu.matmul %0, %1, %cst_4 {dimension_numbers = #tpu.dot_dimension_numbers<[1], [0], [0], [1], [0, 0, 1, 1], [], []>} : vector<8x32xf32>, vector<32x256xf32>, vector<8x256xf32> -> vector<8x256xf32>
    %9 = vector.broadcast %7 : vector<1x256xf32> to vector<8x256xf32>
    %10 = arith.mulf %8, %9 : vector<8x256xf32>
    %c0_5 = arith.constant 0 : index
    %c0_6 = arith.constant 0 : index
    %11 = vector.load %arg5[%c0_5, %c0_6] : memref<8x256xf32, #tpu.memory_space<vmem>>, vector<8x256xf32>
    tpu.vector_store %arg5[%c0_5, %c0_6], %10 {strides = array<i32>} : memref<8x256xf32, #tpu.memory_space<vmem>>, vector<8x256xf32>,
    %c0_7 = arith.constant 0 : index
    %c0_8 = arith.constant 0 : index
    %12 = vector.load %arg3[%c0_7, %c0_8] : memref<8x1xi32, #tpu.memory_space<vmem>>, vector<8x1xi32>
    %13 = tpu.iota {dimensions = array<i32: 1>} : vector<8x256xi32>
    %c256_i32 = arith.constant 256 : i32
    %14 = arith.muli %arg0, %c256_i32 : i32
    %15 = vector.broadcast %14 : i32 to vector<8x256xi32>
    %16 = arith.addi %13, %15 : vector<8x256xi32>
    %17 = vector.broadcast %12 : vector<8x1xi32> to vector<8x256xi32>
    %18 = arith.cmpi eq, %16, %17 : vector<8x256xi32>
    %c0_i32 = arith.constant 0 : i32
    %19 = vector.broadcast %c0_i32 : i32 to vector<8x1xi32>
    %20 = arith.cmpi sge, %12, %19 : vector<8x1xi32>
    %21 = vector.broadcast %20 : vector<8x1xi1> to vector<8x256xi1>
    %22 = arith.andi %18, %21 : vector<8x256xi1>
    %cst_9 = arith.constant -1.000000e+00 : f32
    %cst_10 = arith.constant 1.000000e+00 : f32
    %23 = vector.broadcast %cst_9 : f32 to vector<8x256xf32>
    %24 = arith.maximumf %23, %10 : vector<8x256xf32>
    %25 = vector.broadcast %cst_10 : f32 to vector<8x256xf32>
    %26 = arith.minimumf %25, %24 : vector<8x256xf32>
    %27 = arith.mulf %26, %26 : vector<8x256xf32>
    %cst_11 = arith.constant 1.000000e+00 : f32
    %28 = vector.broadcast %cst_11 : f32 to vector<8x256xf32>
    %29 = arith.subf %28, %27 : vector<8x256xf32>
    %cst_12 = arith.constant 0.000000e+00 : f32
    %30 = vector.broadcast %cst_12 : f32 to vector<8x256xf32>
    %31 = arith.maximumf %29, %30 : vector<8x256xf32>
    %32 = math.sqrt %31 : vector<8x256xf32>
    %cst_13 = arith.constant 0.87758255 : f32
    %33 = vector.broadcast %cst_13 : f32 to vector<8x256xf32>
    %34 = arith.mulf %26, %33 : vector<8x256xf32>
    %cst_14 = arith.constant 0.47942555 : f32
    %35 = vector.broadcast %cst_14 : f32 to vector<8x256xf32>
    %36 = arith.mulf %32, %35 : vector<8x256xf32>
    %37 = arith.subf %34, %36 : vector<8x256xf32>
    %cst_15 = arith.constant 0.000000e+00 : f32
    %38 = vector.broadcast %cst_15 : f32 to vector<8x256xf32>
    %39 = arith.subf %37, %38 : vector<8x256xf32>
    %40 = arith.select %22, %39, %10 : vector<8x256xi1>, vector<8x256xf32>
    %cst_16 = arith.constant 6.400000e+01 : f32
    %41 = vector.broadcast %cst_16 : f32 to vector<8x256xf32>
    %42 = arith.mulf %40, %41 : vector<8x256xf32>
    %c0_17 = arith.constant 0 : index
    %c0_18 = arith.constant 0 : index
    %43 = vector.load %arg4[%c0_17, %c0_18] : memref<8x256xf32, #tpu.memory_space<vmem>>, vector<8x256xf32>
    tpu.vector_store %arg4[%c0_17, %c0_18], %42 {strides = array<i32>} : memref<8x256xf32, #tpu.memory_space<vmem>>, vector<8x256xf32>,
    return
  }
  func.func @transform_0(%arg0: i32) -> (i32, i32) {
    %c0_i32 = arith.constant 0 : i32
    %c0_i32_0 = arith.constant 0 : i32
    %c0_i32_1 = arith.constant 0 : i32
    return %c0_i32, %c0_i32_0 : i32, i32
  }
  func.func @transform_1(%arg0: i32) -> (i32, i32) {
    %c0_i32 = arith.constant 0 : i32
    %c0_i32_0 = arith.constant 0 : i32
    return %c0_i32, %arg0 : i32, i32
  }
  func.func @transform_2(%arg0: i32) -> (i32, i32) {
    %c0_i32 = arith.constant 0 : i32
    %c0_i32_0 = arith.constant 0 : i32
    %c0_i32_1 = arith.constant 0 : i32
    return %c0_i32, %c0_i32_0 : i32, i32
  }
  func.func @transform_3(%arg0: i32) -> (i32, i32) {
    %c0_i32 = arith.constant 0 : i32
    %c0_i32_0 = arith.constant 0 : i32
    return %c0_i32, %arg0 : i32, i32
  }
  func.func @transform_4(%arg0: i32) -> (i32, i32) {
    %c0_i32 = arith.constant 0 : i32
    %c0_i32_0 = arith.constant 0 : i32
    return %c0_i32, %arg0 : i32, i32
  }
}

</mosaic_0001>

<llo_original>
// kernel: tpu_custom_call.1
$region0: #{tpu_custom_call.1}
  #allocation0 [shape = 'u32[]', space=smem, size = 0x4, offset = 0x4, fixed_abs, tag = 'smem constant byte address 0x4 - core index']
  #allocation1 [shape = 'u32[72,128]{1,0:T(1,128)}', space=vmem, size = 0x9000, scoped, tag = 'internal scratch']
  %s0 = inlined_call_operand.vmem [shape: f32[8,32], index: 0, kind: input, shape index: {}]
  %s1 = inlined_call_operand.hbm [shape: f32[32,512], index: 1, kind: input, shape index: {}]
  %s2 = inlined_call_operand.vmem [shape: s32[8,1], index: 2, kind: input, shape index: {}]
  %s3 = inlined_call_operand.hbm [shape: f32[8,512], index: 3, kind: output, shape index: {0}]
  %s4 = inlined_call_operand.hbm [shape: f32[8,512], index: 4, kind: output, shape index: {1}]
  %5 = xla_tuple %s3, %s4
  %s6 = sld [smem:[#allocation0]]
  $region57: #{tpu_custom_call.1} parent=0
    _
  %s8 = ssub.s32 1, %s6
  %s9 = scalar_select 0, %s8, %s6
  $region1: #{tpu_custom_call.1} parent=0
    #allocation2 [shape = 'u8[65536]{0}', space=vmem, size = 0x10000, scoped, tag = 'input window, operand 1']
    #allocation3 [shape = 's32[2]{0}', space=sflag, size = 0x8, scoped, tag = 'scoped memory for tpu_custom_call.1']
    #allocation4 [shape = 's32[2]{0}', space=sflag, size = 0x8, scoped, tag = 'scoped memory for tpu_custom_call.1']
    #allocation5 [shape = 'u8[16384]{0}', space=vmem, size = 0x4000, scoped, tag = 'output window, operand 0']
    #allocation6 [shape = 'u8[16384]{0}', space=vmem, size = 0x4000, scoped, tag = 'output window, operand 1']
    #allocation7 [shape = 's32[2]{0}', space=sflag, size = 0x8, scoped, tag = 'scoped memory for tpu_custom_call.1']
    %10 = vsyncpa [#allocation3], 0
    %s11 = scalar_lea.sflag [#allocation3], 1
    %12 = vsyncpa %s11, 0
    %13 = vsyncpa [#allocation4], 0
    %s14 = scalar_lea.sflag [#allocation4], 1
    %15 = vsyncpa %s14, 0
    %16 = vsyncpa [#allocation7], 0
    %s17 = scalar_lea.sflag [#allocation7], 1
    %18 = vsyncpa %s17, 0
    loop: start=0, step=1, limit=4
    $region2: #{tpu_custom_call.1} parent=1 // loop_pre_header
      _
    $region3: #{tpu_custom_call.1} parent=1 // loop_header
      %s20 = sphi 0, %s24
      %p21 = scmp.ge.s32.totalorder %s20, 4
      %s28 = sphi 0, %s28
      %s30 = sphi 0, %s28
      %s31 = sphi 0, %s30
      %s45 = sphi 0, %s31
      %s51 = sphi 0, %s53
      %s54 = sphi 0, %s51
      %s55 = sphi 0, %s54
      %s71 = sphi 0, %s55
      %s75 = sphi 0, %s75
      %s77 = sphi 0, %s75
      %s78 = sphi 0, %s77
      %s92 = sphi 0, %s78
      %s98 = sphi 0, %s100
      %s101 = sphi 0, %s98
      %s102 = sphi 0, %s101
      %s118 = sphi 0, %s102
      %s124 = sphi 0, %s126
      %s127 = sphi 0, %s124
      %s128 = sphi 0, %s127
      %s144 = sphi 0, %s128
    $region4: #{tpu_custom_call.1} parent=1 // loop_header_branch
      %23 = sbr.rel (%p21) target = $region8
    $region5: #{tpu_custom_call.1} parent=1 // loop_body
      %s25 = ssub.s32 %s20, 1
      %s26 = ssub.s32 %s20, 2
      %s27 = sadd.s32 %s20, 1
      %s29 = sadd.s32 %s28, 1
      %p32 = scmp.eq.s32.totalorder %s20, 1
      %p33 = scmp.ne.s32.totalorder %s28, %s30
      %p34 = scmp.eq.s32.totalorder %s20, 0
      %p35 = por %p33, %p34
      %p36 = scmp.ne.s32.totalorder %s28, %s30
      %p37 = scmp.eq.s32.totalorder %s25, 1
      %p38 = por %p36, %p37
      %p39 = scmp.ne.s32.totalorder %s30, %s31
      %p40 = scmp.eq.s32.totalorder %s25, 0
      %p41 = por %p39, %p40
      %p42 = scmp.ne.s32.totalorder %s30, %s31
      %p43 = scmp.eq.s32.totalorder %s26, 1
      %p44 = por %p42, %p43
      %p46 = scmp.ne.s32.totalorder %s31, %s45
      %p47 = scmp.eq.s32.totalorder %s26, 0
      %p48 = por %p46, %p47
      %s49 = ssub.s32 %s20, %s27
      %p50 = scmp.eq.s32.totalorder %s49, 0
      %s52 = sadd.s32 %s51, 1
      %s53 = scalar_select %p50, %s51, %s52
      %p56 = pneg %p50
      %p57 = scmp.eq.s32.totalorder %s20, 1
      %p58 = por %p56, %p57
      %p59 = scmp.ne.s32.totalorder %s51, %s54
      %p60 = scmp.eq.s32.totalorder %s20, 0
      %p61 = por %p59, %p60
      %p62 = scmp.ne.s32.totalorder %s51, %s54
      %p63 = scmp.eq.s32.totalorder %s25, 1
      %p64 = por %p62, %p63
      %p65 = scmp.ne.s32.totalorder %s54, %s55
      %p66 = scmp.eq.s32.totalorder %s25, 0
      %p67 = por %p65, %p66
      %p68 = scmp.ne.s32.totalorder %s54, %s55
      %p69 = scmp.eq.s32.totalorder %s26, 1
      %p70 = por %p68, %p69
      %p72 = scmp.ne.s32.totalorder %s55, %s71
      %p73 = scmp.eq.s32.totalorder %s26, 0
      %p74 = por %p72, %p73
      %s76 = sadd.s32 %s75, 1
      %p79 = scmp.eq.s32.totalorder %s20, 1
      %p80 = scmp.ne.s32.totalorder %s75, %s77
      %p81 = scmp.eq.s32.totalorder %s20, 0
      %p82 = por %p80, %p81
      %p83 = scmp.ne.s32.totalorder %s75, %s77
      %p84 = scmp.eq.s32.totalorder %s25, 1
      %p85 = por %p83, %p84
      %p86 = scmp.ne.s32.totalorder %s77, %s78
      %p87 = scmp.eq.s32.totalorder %s25, 0
      %p88 = por %p86, %p87
      %p89 = scmp.ne.s32.totalorder %s77, %s78
      %p90 = scmp.eq.s32.totalorder %s26, 1
      %p91 = por %p89, %p90
      %p93 = scmp.ne.s32.totalorder %s78, %s92
      %p94 = scmp.eq.s32.totalorder %s26, 0
      %p95 = por %p93, %p94
      %s96 = ssub.s32 %s20, %s27
      %p97 = scmp.eq.s32.totalorder %s96, 0
      %s99 = sadd.s32 %s98, 1
      %s100 = scalar_select %p97, %s98, %s99
      %p103 = pneg %p97
      %p104 = scmp.eq.s32.totalorder %s20, 1
      %p105 = por %p103, %p104
      %p106 = scmp.ne.s32.totalorder %s98, %s101
      %p107 = scmp.eq.s32.totalorder %s20, 0
      %p108 = por %p106, %p107
      %p109 = scmp.ne.s32.totalorder %s98, %s101
      %p110 = scmp.eq.s32.totalorder %s25, 1
      %p111 = por %p109, %p110
      %p112 = scmp.ne.s32.totalorder %s101, %s102
      %p113 = scmp.eq.s32.totalorder %s25, 0
      %p114 = por %p112, %p113
      %p115 = scmp.ne.s32.totalorder %s101, %s102
      %p116 = scmp.eq.s32.totalorder %s26, 1
      %p117 = por %p115, %p116
      %p119 = scmp.ne.s32.totalorder %s102, %s118
      %p120 = scmp.eq.s32.totalorder %s26, 0
      %p121 = por %p119, %p120
      %s122 = ssub.s32 %s20, %s27
      %p123 = scmp.eq.s32.totalorder %s122, 0
      %s125 = sadd.s32 %s124, 1
      %s126 = scalar_select %p123, %s124, %s125
      %p129 = pneg %p123
      %p130 = scmp.eq.s32.totalorder %s20, 1
      %p131 = por %p129, %p130
      %p132 = scmp.ne.s32.totalorder %s124, %s127
      %p133 = scmp.eq.s32.totalorder %s20, 0
      %p134 = por %p132, %p133
      %p135 = scmp.ne.s32.totalorder %s124, %s127
      %p136 = scmp.eq.s32.totalorder %s25, 1
      %p137 = por %p135, %p136
      %p138 = scmp.ne.s32.totalorder %s127, %s128
      %p139 = scmp.eq.s32.totalorder %s25, 0
      %p140 = por %p138, %p139
      %p141 = scmp.ne.s32.totalorder %s127, %s128
      %p142 = scmp.eq.s32.totalorder %s26, 1
      %p143 = por %p141, %p142
      %p145 = scmp.ne.s32.totalorder %s128, %s144
      %p146 = scmp.eq.s32.totalorder %s26, 0
      %p147 = por %p145, %p146
      %p148 = scmp.le.s32.totalorder 1, %s20
      %p149 = scmp.lt.s32.totalorder %s20, 3
      %p150 = pnand %p148, %p149
      %p151 = pneg %p150
      // Predicated region
      $region9: #{tpu_custom_call.1} parent=5 // pred_check
        _
      $region10: #{tpu_custom_call.1} parent=5 // pred_check_branch
        %153 = sbr.rel (%p150) target = $region12
      $region11: #{tpu_custom_call.1} parent=5 // pred_region
        %s154 = ssub.s32 %s20, 1
        // Predicated region
        $region13: #{tpu_custom_call.1} parent=11 // pred_check
          %p155 = pneg %p41
        $region14: #{tpu_custom_call.1} parent=11 // pred_check_branch
          %157 = sbr.rel (%p155) target = $region16
        $region15: #{tpu_custom_call.1} parent=11 // pred_region
          _
        $region16: #{tpu_custom_call.1} parent=11 // pred_fallthru
          _
        // Predicated region
        $region17: #{tpu_custom_call.1} parent=11 // pred_check
          %p158 = pneg %p88
        $region18: #{tpu_custom_call.1} parent=11 // pred_check_branch
          %160 = sbr.rel (%p158) target = $region20
        $region19: #{tpu_custom_call.1} parent=11 // pred_region
          _
        $region20: #{tpu_custom_call.1} parent=11 // pred_fallthru
          _
      $region12: #{tpu_custom_call.1} parent=5 // pred_fallthru
        _
      %p161 = scmp.lt.s32.totalorder %s20, 2
      // Predicated region
      $region21: #{tpu_custom_call.1} parent=5 // pred_check
        %p162 = pneg %p161
      $region22: #{tpu_custom_call.1} parent=5 // pred_check_branch
        %164 = sbr.rel (%p162) target = $region24
      $region23: #{tpu_custom_call.1} parent=5 // pred_region
        // Predicated region
        $region25: #{tpu_custom_call.1} parent=23 // pred_check
          %p165 = pneg %p61
        $region26: #{tpu_custom_call.1} parent=23 // pred_check_branch
          %167 = sbr.rel (%p165) target = $region28
        $region27: #{tpu_custom_call.1} parent=23 // pred_region
          %s168 = sand.u32 %s51, 1
          %s169 = scalar_lea.sflag [#allocation3], %s168
          %s170 = sand.u32 %s51, 1
          %s171 = smul.addr %s170, 64
          %s172 = scalar_lea.vmem [#allocation2], %s171
          %s173 = smul.u32 2, %s20
          %175 = vsyncadd %s169, 0
          %s176 = smul.addr %s173, 8
          %s177 = scalar_lea.hbm %s1, %s176
          %s178 = sshll.u32 %s177, 4
          %s179 = int_to_ptr.hbm [resolvable:$true] %s178
          %s180 = sshll.u32 %s172, 4
          %s181 = int_to_ptr.vmem [resolvable:$true] %s180
          %186 = dma.hbm_to_vmem [thread:$0]  %s179, 1024, %s181, %s169, 512, 256, 16
        $region28: #{tpu_custom_call.1} parent=23 // pred_fallthru
          _
      $region24: #{tpu_custom_call.1} parent=5 // pred_fallthru
        _
      %p187 = scmp.le.s32.totalorder 1, %s20
      %p188 = scmp.lt.s32.totalorder %s20, 3
      %p189 = pnand %p187, %p188
      %p190 = pneg %p189
      // Predicated region
      $region29: #{tpu_custom_call.1} parent=5 // pred_check
        _
      $region30: #{tpu_custom_call.1} parent=5 // pred_check_branch
        %192 = sbr.rel (%p189) target = $region32
      $region31: #{tpu_custom_call.1} parent=5 // pred_region
        %s193 = ssub.s32 %s20, 1
        %s194 = sand.u32 %s54, 1
        %s195 = scalar_lea.sflag [#allocation3], %s194
        %s196 = sand.u32 %s54, 1
        %s197 = smul.addr %s196, 64
        %s198 = scalar_lea.vmem [#allocation2], %s197
        // Predicated region
        $region33: #{tpu_custom_call.1} parent=31 // pred_check
          %p199 = pneg %p67
        $region34: #{tpu_custom_call.1} parent=31 // pred_check_branch
          %201 = sbr.rel (%p199) target = $region36
        $region35: #{tpu_custom_call.1} parent=31 // pred_region
          %203 = dma.done %s195, 1024
        $region36: #{tpu_custom_call.1} parent=31 // pred_fallthru
          _
        %p204 = pneg %p41
        %p205 = pneg %p38
        %s206 = sand.u32 %s54, 1
        %s207 = scalar_lea.sflag [#allocation3], %s206
        %s208 = sand.u32 %s54, 1
        %s209 = smul.addr %s208, 64
        %s210 = scalar_lea.vmem [#allocation2], %s209
        %p211 = pneg %p67
        %p212 = pneg %p64
        %p213 = pneg %p88
        %p214 = pneg %p85
        %p215 = pneg %p114
        %p216 = pneg %p111
        %s217 = sand.u32 %s101, 1
        %s218 = scalar_lea.sflag [#allocation4], %s217
        %s219 = sand.u32 %s101, 1
        %s220 = smul.addr %s219, 16
        %s221 = scalar_lea.vmem [#allocation5], %s220
        %p222 = pneg %p140
        %p223 = pneg %p137
        %s224 = sand.u32 %s127, 1
        %s225 = scalar_lea.sflag [#allocation7], %s224
        %s226 = sand.u32 %s127, 1
        %s227 = smul.addr %s226, 16
        %s228 = scalar_lea.vmem [#allocation6], %s227
        %s229 = smul.u32 2, %s25
        %s230 = smul.u32 2, %s25
        %s231 = smul.u32 2, %s25
        %v232 = vld [vmem:[%s0] sm:$0xff]
        %v233 = vld [vmem:[%s198] sm:$0xff]
        %v234 = vld [vmem:[%s198 + $0x8] sm:$0xff]
        %v235 = vld [vmem:[%s198 + $0x10] sm:$0xff]
        %v236 = vld [vmem:[%s198 + $0x18] sm:$0xff]
        %v237 = vld [vmem:[%s198 + $0x20] sm:$0xff]
        %v238 = vld [vmem:[%s198 + $0x28] sm:$0xff]
        %v239 = vld [vmem:[%s198 + $0x30] sm:$0xff]
        %v240 = vld [vmem:[%s198 + $0x38] sm:$0xff]
        %v241 = vmul.f32 %v233, %v233
        %v242 = vmul.f32 %v234, %v234
        %v243 = vmul.f32 %v235, %v235
        %v244 = vmul.f32 %v236, %v236
        %v245 = vmul.f32 %v237, %v237
        %v246 = vmul.f32 %v238, %v238
        %v247 = vmul.f32 %v239, %v239
        %v248 = vmul.f32 %v240, %v240
        %v249 = vadd.f32 %v241, %v243
        %v250 = vadd.f32 %v249, %v245
        %v251 = vadd.f32 %v250, %v247
        %v252 = vrot.slane %v251, 4
        %v253 = vadd.f32 %v251, %v252
        %v254 = vrot.slane %v253, 2
        %v255 = vadd.f32 %v253, %v254
        %v256 = vrot.slane %v255, 1
        %v257 = vadd.f32 %v255, %v256
        %v258 = vadd.f32 %v242, %v244
        %v259 = vadd.f32 %v258, %v246
        %v260 = vadd.f32 %v259, %v248
        %v261 = vrot.slane %v260, 4
        %v262 = vadd.f32 %v260, %v261
        %v263 = vrot.slane %v262, 2
        %v264 = vadd.f32 %v262, %v263
        %v265 = vrot.slane %v264, 1
        %v266 = vadd.f32 %v264, %v265
        %v267 = vmax.f32 %v257, 1e-24
        %v268 = vmax.f32 %v266, 1e-24
        %v269 = vrsqrt.pop %v267
        %v270 = vmul.f32 %v269, %v267
        %v271 = vmul.f32 %v270, %v269
        %v272 = vmul.f32 0.5, %v271
        %v273 = vsub.f32 1.5, %v272
        %v274 = vmul.f32 %v269, %v273
        %vm275 = vweird.f32 %v267
        %vm276 = vweird.f32 %v269
        %vm277 = vmor %vm275, %vm276
        %v278 = vsel %vm277, %v269, %v274
        %v279 = vrsqrt.pop %v268
        %v280 = vmul.f32 %v279, %v268
        %v281 = vmul.f32 %v280, %v279
        %v282 = vmul.f32 0.5, %v281
        %v283 = vsub.f32 1.5, %v282
        %v284 = vmul.f32 %v279, %v283
        %vm285 = vweird.f32 %v268
        %vm286 = vweird.f32 %v279
        %vm287 = vmor %vm285, %vm286
        %v288 = vsel %vm287, %v279, %v284
        %vm289 = vcmask 261120
        %v291 = vsel %vm289, %v232, 0
        %293 = vmatpush.msra.mxu0 0.0
        %294 = vmatpush.msra.mxu0 0.0
        %295 = vmatpush.msra.mxu0 0.0
        %296 = vmatpush.msra.mxu0 0.0
        %297 = vmatpush.msra.mxu0 0.0
        %298 = vmatpush.msra.mxu0 0.0
        %299 = vmatpush.msra.mxu0 0.0
        %300 = vmatpush.msra.mxu0 0.0
        %301 = vmatpush.msra.mxu0 0.0
        %302 = vmatpush.msra.mxu0 0.0
        %303 = vmatpush.msra.mxu0 0.0
        %304 = vmatpush.msra.mxu0 0.0
        %305 = vmatpush.msra.mxu0 %v239
        %306 = vmatpush.msra.mxu0 %v237
        %307 = vmatpush.msra.mxu0 %v235
        %308 = vmatpush.msra.mxu0 %v233
        %309 = vmatmul.f32.gmra.mxu0 %v291
        %v310 = vpop.f32.mrf.mxu0
        %v311 = vadd.f32 0.0, %v310
        %312 = vdwg.mxu0
        %313 = vmatpush.msra.mxu0 0.0
        %314 = vmatpush.msra.mxu0 0.0
        %315 = vmatpush.msra.mxu0 0.0
        %316 = vmatpush.msra.mxu0 0.0
        %317 = vmatpush.msra.mxu0 0.0
        %318 = vmatpush.msra.mxu0 0.0
        %319 = vmatpush.msra.mxu0 0.0
        %320 = vmatpush.msra.mxu0 0.0
        %321 = vmatpush.msra.mxu0 0.0
        %322 = vmatpush.msra.mxu0 0.0
        %323 = vmatpush.msra.mxu0 0.0
        %324 = vmatpush.msra.mxu0 0.0
        %325 = vmatpush.msra.mxu0 %v240
        %326 = vmatpush.msra.mxu0 %v238
        %327 = vmatpush.msra.mxu0 %v236
        %328 = vmatpush.msra.mxu0 %v234
        %329 = vmatmul.f32.gmra.mxu0 %v291
        %v330 = vpop.f32.mrf.mxu0
        %v331 = vadd.f32 0.0, %v330
        %332 = vdwg.mxu0
        %v333 = vmul.f32 %v311, %v278
        %v334 = vmul.f32 %v331, %v288
        %335 = vst [vmem:[%s228] sm:$0xff] %v333
        %336 = vst [vmem:[%s228 + $0x8] sm:$0xff] %v334
        %v337 = vld [vmem:[%s2] sm:$0xff]
        %v338 = vlaneseq
        %v339 = vand.u32 %v338, 127
        %v340 = vadd.s32 %v339, 128
        %s341 = smul.u32 %s25, 256
        %v342 = vstv %s341
        %v343 = vadd.s32 %v339, %v342
        %v344 = vadd.s32 %v340, %v342
        %345 = vset.pattern.permute.xlu0 0
        %346 = vperm.xlu0 %345, %v337
        %v347 = vpop.permute.xlu0 %346
        %vm348 = vcmp.eq.s32.totalorder %v343, %v347
        %vm349 = vcmp.eq.s32.totalorder %v344, %v347
        %vm350 = vcmp.ge.s32.totalorder %v337, 0
        %v351 = vsel %vm350, 1, 0
        %352 = vset.pattern.permute.xlu0 0
        %353 = vperm.xlu0 %352, %v351
        %v354 = vpop.permute.xlu0 %353
        %vm355 = vcmp.eq.s32.totalorder %v354, 1
        %vm356 = vmand %vm348, %vm355
        %vm357 = vmand %vm349, %vm355
        %v358 = vmax.f32 %v333, -1.0
        %v359 = vmax.f32 %v334, -1.0
        %v360 = vmin.f32 %v358, 1.0
        %v361 = vmin.f32 %v359, 1.0
        %v362 = vmul.f32 %v360, %v360
        %v363 = vmul.f32 %v361, %v361
        %v364 = vsub.f32 1.0, %v362
        %v365 = vsub.f32 1.0, %v363
        %v366 = vmax.f32 %v364, 0.0
        %v367 = vmax.f32 %v365, 0.0
        %v368 = vrsqrt.pop %v366
        %v369 = vmul.f32 %v368, %v366
        %v370 = vmul.f32 %v369, %v368
        %v371 = vmul.f32 0.5, %v370
        %v372 = vsub.f32 1.5, %v371
        %v373 = vmul.f32 %v368, %v372
        %v374 = vmul.f32 %v366, %v373
        %vm375 = vcmp.eq.f32.partialorder %v366, inf
        %v376 = vsel %vm375, %v366, %v374
        %vm377 = vcmp.eq.f32.partialorder %v366, 0.0
        %v378 = vand.u32 %v366, 2147483648
        %v379 = vsel %vm377, %v378, %v376
        %v380 = vrsqrt.pop %v367
        %v381 = vmul.f32 %v380, %v367
        %v382 = vmul.f32 %v381, %v380
        %v383 = vmul.f32 0.5, %v382
        %v384 = vsub.f32 1.5, %v383
        %v385 = vmul.f32 %v380, %v384
        %v386 = vmul.f32 %v367, %v385
        %vm387 = vcmp.eq.f32.partialorder %v367, inf
        %v388 = vsel %vm387, %v367, %v386
        %vm389 = vcmp.eq.f32.partialorder %v367, 0.0
        %v390 = vand.u32 %v367, 2147483648
        %v391 = vsel %vm389, %v390, %v388
        %v392 = vmul.f32 %v360, 0.87758255
        %v393 = vmul.f32 %v361, 0.87758255
        %v394 = vmul.f32 %v379, 0.47942555
        %v395 = vmul.f32 %v391, 0.47942555
        %v396 = vsub.f32 %v392, %v394
        %v397 = vsub.f32 %v393, %v395
        %v398 = vsel %vm356, %v396, %v333
        %v399 = vsel %vm357, %v397, %v334
        %v400 = vmul.f32 %v398, 64.0
        %v401 = vmul.f32 %v399, 64.0
        %402 = vst [vmem:[%s221] sm:$0xff] %v400
        %403 = vst [vmem:[%s221 + $0x8] sm:$0xff] %v401
        %s404 = sand.u32 %s101, 1
        %s405 = scalar_lea.sflag [#allocation4], %s404
        %s406 = sand.u32 %s101, 1
        %s407 = smul.addr %s406, 16
        %s408 = scalar_lea.vmem [#allocation5], %s407
        %s409 = sand.u32 %s127, 1
        %s410 = scalar_lea.sflag [#allocation7], %s409
        %s411 = sand.u32 %s127, 1
        %s412 = smul.addr %s411, 16
        %s413 = scalar_lea.vmem [#allocation6], %s412
        // Predicated region
        $region37: #{tpu_custom_call.1} parent=31 // pred_check
          %p414 = pneg %p111
        $region38: #{tpu_custom_call.1} parent=31 // pred_check_branch
          %416 = sbr.rel (%p414) target = $region40
        $region39: #{tpu_custom_call.1} parent=31 // pred_region
          %s417 = smul.u32 2, %s25
          %419 = vsyncadd %s405, 0
          %s420 = smul.addr %s417, 8
          %s421 = scalar_lea.hbm %s3, %s420
          %s423 = sshll.u32 %s408, 4
          %s424 = int_to_ptr.vmem [resolvable:$true] %s423
          %s425 = sshll.u32 %s421, 4
          %s426 = int_to_ptr.hbm [resolvable:$true] %s425
          %428 = dma.vmem_to_hbm [thread:$0]  %s424, 256, %s426, %s405
        $region40: #{tpu_custom_call.1} parent=31 // pred_fallthru
          _
        // Predicated region
        $region41: #{tpu_custom_call.1} parent=31 // pred_check
          %p429 = pneg %p137
        $region42: #{tpu_custom_call.1} parent=31 // pred_check_branch
          %431 = sbr.rel (%p429) target = $region44
        $region43: #{tpu_custom_call.1} parent=31 // pred_region
          %s432 = smul.u32 2, %s25
          %434 = vsyncadd %s410, 0
          %s435 = smul.addr %s432, 8
          %s436 = scalar_lea.hbm %s4, %s435
          %s438 = sshll.u32 %s413, 4
          %s439 = int_to_ptr.vmem [resolvable:$true] %s438
          %s440 = sshll.u32 %s436, 4
          %s441 = int_to_ptr.hbm [resolvable:$true] %s440
          %443 = dma.vmem_to_hbm [thread:$0]  %s439, 256, %s441, %s410
        $region44: #{tpu_custom_call.1} parent=31 // pred_fallthru
          _
      $region32: #{tpu_custom_call.1} parent=5 // pred_fallthru
        _
      %p444 = scmp.le.s32.totalorder 2, %s20
      // Predicated region
      $region45: #{tpu_custom_call.1} parent=5 // pred_check
        %p445 = pneg %p444
      $region46: #{tpu_custom_call.1} parent=5 // pred_check_branch
        %447 = sbr.rel (%p445) target = $region48
      $region47: #{tpu_custom_call.1} parent=5 // pred_region
        %s448 = ssub.s32 %s20, 2
        // Predicated region
        $region49: #{tpu_custom_call.1} parent=47 // pred_check
          %p449 = pneg %p117
        $region50: #{tpu_custom_call.1} parent=47 // pred_check_branch
          %451 = sbr.rel (%p449) target = $region52
        $region51: #{tpu_custom_call.1} parent=47 // pred_region
          %s452 = sand.u32 %s102, 1
          %s453 = scalar_lea.sflag [#allocation4], %s452
          %s454 = sand.u32 %s102, 1
          %s455 = smul.addr %s454, 16
          %s456 = scalar_lea.vmem [#allocation5], %s455
          %458 = dma.done %s453, 256
        $region52: #{tpu_custom_call.1} parent=47 // pred_fallthru
          _
        // Predicated region
        $region53: #{tpu_custom_call.1} parent=47 // pred_check
          %p459 = pneg %p143
        $region54: #{tpu_custom_call.1} parent=47 // pred_check_branch
          %461 = sbr.rel (%p459) target = $region56
        $region55: #{tpu_custom_call.1} parent=47 // pred_region
          %s462 = sand.u32 %s128, 1
          %s463 = scalar_lea.sflag [#allocation7], %s462
          %s464 = sand.u32 %s128, 1
          %s465 = smul.addr %s464, 16
          %s466 = scalar_lea.vmem [#allocation6], %s465
          %468 = dma.done %s463, 256
        $region56: #{tpu_custom_call.1} parent=47 // pred_fallthru
          _
      $region48: #{tpu_custom_call.1} parent=5 // pred_fallthru
        _
    $region6: #{tpu_custom_call.1} parent=1 // loop_footer
      %s24 = sadd.s32 1, %s20
    $region7: #{tpu_custom_call.1} parent=1 // loop_footer_branch
      %19 = sbr.rel target = $region3
    $region8: #{tpu_custom_call.1} parent=1 // loop_exit
      _
    %469 = vsyncpa [#allocation3], 1
    %s470 = scalar_lea.sflag [#allocation3], 1
    %471 = vsyncpa %s470, 1
    %472 = vsyncpa [#allocation4], 1
    %s473 = scalar_lea.sflag [#allocation4], 1
    %474 = vsyncpa %s473, 1
    %475 = vsyncpa [#allocation7], 1
    %s476 = scalar_lea.sflag [#allocation7], 1
    %477 = vsyncpa %s476, 1

</llo_original>
